<compile_context>
chip_gen: v6e
topology: v6e:2x2x1
jax: 0.10.0
libtpu: 0.0.40
codegen_flags: <defaults>
</compile_context>

<pallas_src>
import jax
import jax.numpy as jnp
from jax.experimental import pallas as pl
from jax.experimental.pallas import tpu as pltpu


def attention_kernel(x_ref, w_ref, b_ref, ctx_ref, attn_ref):
    # x_ref:    (BB, T, H)  rnn_outputs block (native dtype)
    # w_ref:    (1, H)      nn.Linear(H, 1).weight   (VMEM)
    # b_ref:    (1,)        nn.Linear(H, 1).bias     (SMEM scalar)
    # ctx_ref:  (BB, H)     context output
    # attn_ref: (BB, T)     attention weights, lane-dense (T on lanes)
    x = x_ref[...]                                   # keep native dtype (no f32 copy)
    bb, t, h = x.shape

    # attn scores: <x[b, t, :], w> + bias  -> (BB, T), T on the lane axis.
    # Multiply in the native dtype; accumulate the lane reduction in f32.
    w_row = w_ref[...].reshape(1, 1, h).astype(x.dtype)
    scores = jnp.sum((x * w_row).astype(jnp.float32), axis=-1) + b_ref[0]

    # Numerically-stable softmax over the sequence (lane) axis — exact divide
    # (matches torch.softmax; the approx reciprocal was the accuracy bug).
    m = jnp.max(scores, axis=-1, keepdims=True)              # (BB, 1)
    e = jnp.exp(scores - m)                                   # (BB, T)
    denom = jnp.sum(e, axis=-1, keepdims=True)                # (BB, 1)
    weights = e / denom                                       # f32 (BB, T)

    # context[b, h] = sum_t weights[b, t] * x[b, t, h]
    if t >= 128 and h >= 128:
        # Large tiles: batched MXU matmul, native-dtype operands, f32 accumulate.
        ctx = jnp.einsum("bqt,bth->bqh",
                         weights[:, None, :].astype(x.dtype), x,
                         preferred_element_type=jnp.float32)[:, 0, :]
    else:
        # Small T*H: VPU multiply + sublane reduce; avoids BB independent
        # M=1 MXU pushes whose result-path drain would dominate.
        ctx = jnp.sum((weights[:, :, None].astype(x.dtype) * x)
                      .astype(jnp.float32), axis=1)

    ctx_ref[...] = ctx.astype(ctx_ref.dtype)                  # (BB, H)
    attn_ref[...] = weights.astype(attn_ref.dtype)            # (BB, T)


def _choose_block_b(B, T, H, itemsize, x_block_target_bytes):
    """Largest batch block whose x-slab is ~x_block_target_bytes, 8-row aligned."""
    per_row = max(T * H * itemsize, 1)
    bb = max(1, int(x_block_target_bytes // per_row))
    if bb >= B:
        bb = B
        # Megacore (v7x has 2 TCs): prefer >= 2 grid steps on the "parallel"
        # axis when the batch is big enough to keep 8-row aligned blocks.
        if B >= 16:
            half = ((-(-B // 2)) + 7) // 8 * 8
            if 0 < half < B:
                bb = half
        return bb
    bb = max(8, (bb // 8) * 8)          # sublane alignment for the 2-D out blocks
    return min(bb, B)


def attention_forward(rnn_outputs, weight, bias, *, block_b=None,
                      x_block_target_bytes=8 * 1024 * 1024,
                      vmem_limit_bytes=48 * 1024 * 1024):
    """rnn_outputs: (B, T, H); weight: (1, H); bias: (1,).

    Returns (context (B, H), attn_weights (B, T, 1)).
    """
    B, T, H = rnn_outputs.shape
    out_dtype = rnn_outputs.dtype
    itemsize = jnp.dtype(rnn_outputs.dtype).itemsize

    if block_b is None:
        block_b = _choose_block_b(B, T, H, itemsize, x_block_target_bytes)
    block_b = min(block_b, B)
    if block_b < B and block_b % 8 != 0:
        block_b = max(8, (block_b // 8) * 8)
        block_b = min(block_b, B)
    num_blocks = pl.cdiv(B, block_b)
    # TODO(synk): if even an 8-row x block exceeds the VMEM budget (very large
    # T*H), fall back to tiling over T with an online-softmax accumulator.

    bias_smem = jnp.asarray(bias, dtype=jnp.float32).reshape((1,))

    bytes_accessed = int(B * T * H * itemsize                 # x in
                         + B * H * itemsize + B * T * itemsize  # ctx / attn out
                         + weight.size * jnp.dtype(weight.dtype).itemsize)
    cost = pl.CostEstimate(flops=int(4 * B * T * H),
                           transcendentals=int(B * T),
                           bytes_accessed=bytes_accessed)

    ctx, attn = pl.pallas_call(
        attention_kernel,
        out_shape=(
            jax.ShapeDtypeStruct((B, H), out_dtype),
            jax.ShapeDtypeStruct((B, T), out_dtype),   # lane-dense weights
        ),
        grid_spec=pltpu.PrefetchScalarGridSpec(
            num_scalar_prefetch=0,
            grid=(num_blocks,),
            in_specs=[
                pl.BlockSpec((block_b, T, H), lambda i: (i, 0, 0)),
                pl.BlockSpec((1, H), lambda i: (0, 0)),
                pl.BlockSpec(memory_space=pltpu.MemorySpace.SMEM),
            ],
            out_specs=[
                pl.BlockSpec((block_b, H), lambda i: (i, 0)),
                pl.BlockSpec((block_b, T), lambda i: (i, 0)),
            ],
        ),
        compiler_params=pltpu.CompilerParams(
            dimension_semantics=("parallel",),
            vmem_limit_bytes=vmem_limit_bytes,
        ),
        cost_estimate=cost,
    )(rnn_outputs, weight, bias_smem)

    return ctx, attn.reshape(B, T, 1)   # restore the module's (B, T, 1) shape


def attention_reference(rnn_outputs, weight, bias):
    scores = jnp.einsum("bth,oh->bto", rnn_outputs, weight) + bias  # (B, T, 1)
    w = jax.nn.softmax(scores, axis=1)
    ctx = jnp.sum(w * rnn_outputs, axis=1)
    return ctx, w


if __name__ == "__main__":
    B, T, H = 2, 8, 32
    key = jax.random.PRNGKey(0)
    kx, kw, kb = jax.random.split(key, 3)

    rnn_outputs = jax.random.normal(kx, (B, T, H), dtype=jnp.float32)
    # deterministic nn.Linear(H, 1)-shaped params: weight (1, H), bias (1,)
    bound = 1.0 / jnp.sqrt(H)
    weight = jax.random.uniform(kw, (1, H), minval=-bound, maxval=bound,
                                dtype=jnp.float32)
    bias = jax.random.uniform(kb, (1,), minval=-bound, maxval=bound,
                              dtype=jnp.float32)

    ctx, attn = attention_forward(rnn_outputs, weight, bias)
    ctx = jax.block_until_ready(ctx)
    attn = jax.block_until_ready(attn)

    ctx_ref, attn_ref = attention_reference(rnn_outputs, weight, bias)
    assert ctx.shape == (B, H) and attn.shape == (B, T, 1)
    assert jnp.allclose(ctx, ctx_ref, atol=1e-3, rtol=1e-3)
    assert jnp.allclose(attn, attn_ref, atol=1e-3, rtol=1e-3)

    print("KERNEL_OK")
</pallas_src>

<mosaic_0001>
module attributes {stable_mosaic.version = 11 : i64} {
  func.func @attention_kernel(%arg0: i32, %arg1: memref<2x8x32xf32, #tpu.memory_space<vmem>>, %arg2: memref<1x32xf32, #tpu.memory_space<vmem>>, %arg3: memref<1xf32, #tpu.memory_space<smem>>, %arg4: memref<2x32xf32, #tpu.memory_space<vmem>>, %arg5: memref<2x8xf32, #tpu.memory_space<vmem>>) attributes {dimension_semantics = [#tpu.dimension_semantics<parallel>], iteration_bounds = array<i64: 1>, scalar_prefetch = 0 : i64, scratch_operands = 0 : i64, tpu.core_type = #tpu.core_type<tc>, window_params = [{transform_indices = @transform_0, window_bounds = array<i64: 2, 8, 32>}, {pipeline_mode = #tpu.pipeline_mode<synchronous>, transform_indices = @transform_1, window_bounds = array<i64: 1, 32>}, {transform_indices = @transform_2, window_bounds = array<i64: 1>}, {transform_indices = @transform_3, window_bounds = array<i64: 2, 32>}, {transform_indices = @transform_4, window_bounds = array<i64: 2, 8>}]} {
    %c0 = arith.constant 0 : index
    %c0_0 = arith.constant 0 : index
    %c0_1 = arith.constant 0 : index
    %0 = vector.load %arg1[%c0, %c0_0, %c0_1] : memref<2x8x32xf32, #tpu.memory_space<vmem>>, vector<2x8x32xf32>
    %c0_2 = arith.constant 0 : index
    %c0_3 = arith.constant 0 : index
    %1 = vector.load %arg2[%c0_2, %c0_3] : memref<1x32xf32, #tpu.memory_space<vmem>>, vector<1x32xf32>
    %2 = vector.shape_cast %1 : vector<1x32xf32> to vector<1x1x32xf32>
    %3 = vector.broadcast %2 : vector<1x1x32xf32> to vector<2x8x32xf32>
    %4 = arith.mulf %0, %3 : vector<2x8x32xf32>
    %cst = arith.constant dense<0.000000e+00> : vector<2x8xf32>
    %5 = vector.multi_reduction <add>, %4, %cst [2] : vector<2x8x32xf32> to vector<2x8xf32>
    %c0_4 = arith.constant 0 : index
    %6 = memref.load %arg3[%c0_4] : memref<1xf32, #tpu.memory_space<smem>>
    %7 = vector.broadcast %6 : f32 to vector<2x8xf32>
    %8 = arith.addf %5, %7 : vector<2x8xf32>
    %cst_5 = arith.constant dense<0xFF800000> : vector<2xf32>
    %9 = vector.multi_reduction <maximumf>, %8, %cst_5 [1] : vector<2x8xf32> to vector<2xf32>
    %10 = vector.shape_cast %9 : vector<2xf32> to vector<2x1xf32>
    %11 = vector.broadcast %10 : vector<2x1xf32> to vector<2x8xf32>
    %12 = arith.subf %8, %11 : vector<2x8xf32>
    %13 = math.exp %12 : vector<2x8xf32>
    %cst_6 = arith.constant dense<0.000000e+00> : vector<2xf32>
    %14 = vector.multi_reduction <add>, %13, %cst_6 [1] : vector<2x8xf32> to vector<2xf32>
    %15 = vector.shape_cast %14 : vector<2xf32> to vector<2x1xf32>
    %16 = vector.broadcast %15 : vector<2x1xf32> to vector<2x8xf32>
    %17 = arith.divf %13, %16 : vector<2x8xf32>
    %18 = vector.shape_cast %17 : vector<2x8xf32> to vector<2x8x1xf32>
    %19 = vector.broadcast %18 : vector<2x8x1xf32> to vector<2x8x32xf32>
    %20 = arith.mulf %19, %0 : vector<2x8x32xf32>
    %cst_7 = arith.constant dense<0.000000e+00> : vector<2x32xf32>
    %21 = vector.multi_reduction <add>, %20, %cst_7 [1] : vector<2x8x32xf32> to vector<2x32xf32>
    %c0_8 = arith.constant 0 : index
    %c0_9 = arith.constant 0 : index
    %22 = vector.load %arg4[%c0_8, %c0_9] : memref<2x32xf32, #tpu.memory_space<vmem>>, vector<2x32xf32>
    tpu.vector_store %arg4[%c0_8, %c0_9], %21 {strides = array<i32>} : memref<2x32xf32, #tpu.memory_space<vmem>>, vector<2x32xf32>,
    %c0_10 = arith.constant 0 : index
    %c0_11 = arith.constant 0 : index
    %23 = vector.load %arg5[%c0_10, %c0_11] : memref<2x8xf32, #tpu.memory_space<vmem>>, vector<2x8xf32>
    tpu.vector_store %arg5[%c0_10, %c0_11], %17 {strides = array<i32>} : memref<2x8xf32, #tpu.memory_space<vmem>>, vector<2x8xf32>,
    return
  }
  func.func @transform_0(%arg0: i32) -> (i32, i32, i32) {
    %c0_i32 = arith.constant 0 : i32
    %c0_i32_0 = arith.constant 0 : i32
    %c0_i32_1 = arith.constant 0 : i32
    return %arg0, %c0_i32, %c0_i32_0 : i32, i32, i32
  }
  func.func @transform_1(%arg0: i32) -> (i32, i32) {
    %c0_i32 = arith.constant 0 : i32
    %c0_i32_0 = arith.constant 0 : i32
    %c0_i32_1 = arith.constant 0 : i32
    return %c0_i32, %c0_i32_0 : i32, i32
  }
  func.func @transform_2(%arg0: i32) -> i32 {
    %c0_i32 = arith.constant 0 : i32
    %c0_i32_0 = arith.constant 0 : i32
    return %c0_i32 : i32
  }
  func.func @transform_3(%arg0: i32) -> (i32, i32) {
    %c0_i32 = arith.constant 0 : i32
    %c0_i32_0 = arith.constant 0 : i32
    return %arg0, %c0_i32 : i32, i32
  }
  func.func @transform_4(%arg0: i32) -> (i32, i32) {
    %c0_i32 = arith.constant 0 : i32
    %c0_i32_0 = arith.constant 0 : i32
    return %arg0, %c0_i32 : i32, i32
  }
}

</mosaic_0001>

<llo_original>
// kernel: tpu_custom_call.1
$region0: #{tpu_custom_call.1}
  #allocation0 [shape = 'u32[]', space=smem, size = 0x4, offset = 0x4, fixed_abs, tag = 'smem constant byte address 0x4 - core index']
  #allocation1 [shape = 'u32[144,128]{1,0:T(1,128)}', space=vmem, size = 0x12000, scoped, tag = 'internal scratch']
  #allocation2 [shape = 'f32[1]{0:T(128)S(6)}', space=smem, size = 0x200, scoped, tag = 'scoped memory for tpu_custom_call.1']
  %s0 = inlined_call_operand.hbm [shape: f32[2,8,32], index: 0, kind: input, shape index: {}]
  %s1 = inlined_call_operand.vmem [shape: f32[1,32], index: 1, kind: input, shape index: {}]
  %s2 = inlined_call_operand.<no memory space> [shape: f32[1], index: 2, kind: input, shape index: {}]
  %s3 = inlined_call_operand.hbm [shape: f32[2,32], index: 3, kind: output, shape index: {0}]
  %s4 = inlined_call_operand.hbm [shape: f32[2,8], index: 4, kind: output, shape index: {1}]
  %5 = xla_tuple %s3, %s4
  %s6 = sld [smem:[#allocation0]]
  $region34: #{tpu_custom_call.1} parent=0
    _
  %s8 = ssub.s32 1, %s6
  %s9 = scalar_select 0, %s8, %s6
  %10 = sst [smem:[#allocation2]] %s2
  $region1: #{tpu_custom_call.1} parent=0
    #allocation3 [shape = 'u8[8192]{0}', space=vmem, size = 0x2000, scoped, tag = 'input window, operand 0, single buffered']
    #allocation4 [shape = 's32[1]{0}', space=sflag, size = 0x4, scoped, tag = 'scoped memory for tpu_custom_call.1']
    #allocation5 [shape = 's32[1]{0}', space=sflag, size = 0x4, scoped, tag = 'scoped memory for tpu_custom_call.1']
    #allocation6 [shape = 'u8[1024]{0}', space=vmem, size = 0x400, scoped, tag = 'output window, operand 0, single buffered']
    #allocation7 [shape = 'u8[1024]{0}', space=vmem, size = 0x400, scoped, tag = 'output window, operand 1, single buffered']
    #allocation8 [shape = 's32[1]{0}', space=sflag, size = 0x4, scoped, tag = 'scoped memory for tpu_custom_call.1']
    %11 = vsyncpa [#allocation4], 0
    %12 = vsyncpa [#allocation5], 0
    %13 = vsyncpa [#allocation8], 0
    // Predicated region
    $region2: #{tpu_custom_call.1} parent=1 // pred_check
      _
    $region3: #{tpu_custom_call.1} parent=1 // pred_check_branch
      %15 = sbr.rel (0) target = $region5
    $region4: #{tpu_custom_call.1} parent=1 // pred_region
      %s17 = ssub.s32 256, 256
      %18 = vsyncadd [#allocation4], %s17
      %s19 = sshll.u32 [#allocation3], 4
      %s20 = int_to_ptr.vmem [resolvable:$true] %s19
      %25 = dma.hbm_to_vmem [thread:$0]  %s0, 256, %s20, [#allocation4], 128, 128, 8
    $region5: #{tpu_custom_call.1} parent=1 // pred_fallthru
      _
    // Predicated region
    $region6: #{tpu_custom_call.1} parent=1 // pred_check
      _
    $region7: #{tpu_custom_call.1} parent=1 // pred_check_branch
      %27 = sbr.rel (0) target = $region9
    $region8: #{tpu_custom_call.1} parent=1 // pred_region
      _
    $region9: #{tpu_custom_call.1} parent=1 // pred_fallthru
      _
    // Predicated region
    $region10: #{tpu_custom_call.1} parent=1 // pred_check
      _
    $region11: #{tpu_custom_call.1} parent=1 // pred_check_branch
      %29 = sbr.rel (0) target = $region13
    $region12: #{tpu_custom_call.1} parent=1 // pred_region
      _
    $region13: #{tpu_custom_call.1} parent=1 // pred_fallthru
      _
    // Predicated region
    $region14: #{tpu_custom_call.1} parent=1 // pred_check
      _
    $region15: #{tpu_custom_call.1} parent=1 // pred_check_branch
      %31 = sbr.rel (0) target = $region17
    $region16: #{tpu_custom_call.1} parent=1 // pred_region
      %32 = dma.done [#allocation4], 256
    $region17: #{tpu_custom_call.1} parent=1 // pred_fallthru
      _
    %v33 = vld [vmem:[#allocation3] sm:$0xff]
    %v34 = vld [vmem:[#allocation3 + $0x8] sm:$0xff]
    %v35 = vld [vmem:[%s1] sm:$0x1]
    %v37 = vlaneseq
    %v38 = vshrl.u32 %v37, 7
    %v39 = vsub.s32 0, %v38
    %v40 = vrot.slane %v35, %v39
    %v42 = vmul.f32 %v33, %v40
    %v43 = vmul.f32 %v34, %v40
    %vm44 = vcmask 261120
    %v45 = vsel %vm44, %v42, 0.0
    %46 = vadd.xlane.f32.xlu0 %v45
    %v47 = vpop.xlane.xlu0 %46
    %v48 = vsel %vm44, %v43, 0.0
    %49 = vadd.xlane.f32.xlu0 %v48
    %v50 = vpop.xlane.xlu0 %49
    %s51 = sld [smem:[#allocation2]]
    %v52 = vstv %s51
    %v53 = vadd.f32 %v47, %v52
    %v54 = vadd.f32 %v50, %v52
    %v57 = vlaneseq
    %v58 = vand.u32 %v57, 127
    %v59 = vlaneseq
    %v60 = vshrl.u32 %v59, 7
    %v61 = vsub.s32 %v58, %v60
    %v62 = vrot.slane %v53, %v61
    %v63 = vlaneseq
    %v64 = vshrl.u32 %v63, 7
    %v65 = vsub.s32 %v58, %v64
    %v66 = vrot.slane %v54, %v65
    %vm67 = vcmask 1041409
    %v68 = vsel %vm67, %v66, %v62
    %vm70 = vcmask 58368
    %v71 = vsel %vm70, %v68, -inf
    %72 = vmax.xlane.f32.xlu0 %v71
    %v73 = vpop.xlane.xlu0 %72
    %v75 = vlaneseq
    %v76 = vshrl.u32 %v75, 7
    %v77 = vsub.s32 0, %v76
    %v78 = vrot.slane %v73, %v77
    %v79 = vlaneseq
    %v80 = vshrl.u32 %v79, 7
    %v81 = vsub.s32 1, %v80
    %v82 = vrot.slane %v73, %v81
    %v85 = vsub.f32 %v53, %v78
    %v86 = vsub.f32 %v54, %v82
    %v87 = vmul.f32 %v85, 1.442695
    %v88 = vpow.pop %v87
    %v89 = vmul.f32 %v86, 1.442695
    %v90 = vpow.pop %v89
    %93 = vset.pattern.permute.xlu0 0
    %94 = vperm.xlu0 %93, %v88
    %v95 = vpop.permute.xlu0 %94
    %96 = vset.pattern.permute.xlu0 0
    %97 = vperm.xlu0 %96, %v90
    %v98 = vpop.permute.xlu0 %97
    %v99 = vlaneseq
    %v100 = vshrl.u32 %v99, 7
    %v101 = vsub.s32 %v58, %v100
    %v102 = vrot.slane %v95, %v101
    %v103 = vlaneseq
    %v104 = vshrl.u32 %v103, 7
    %v105 = vsub.s32 %v58, %v104
    %v106 = vrot.slane %v98, %v105
    %v107 = vsel %vm67, %v106, %v102
    %v109 = vsel %vm70, %v107, 0.0
    %110 = vadd.xlane.f32.xlu0 %v109
    %v111 = vpop.xlane.xlu0 %110
    %v113 = vlaneseq
    %v114 = vshrl.u32 %v113, 7
    %v115 = vsub.s32 0, %v114
    %v116 = vrot.slane %v111, %v115
    %v117 = vlaneseq
    %v118 = vshrl.u32 %v117, 7
    %v119 = vsub.s32 1, %v118
    %v120 = vrot.slane %v111, %v119
    %v123 = vrcp.pop %v116
    %v124 = vmul.f32 %v88, %v123
    %v125 = vrcp.pop %v120
    %v126 = vmul.f32 %v90, %v125
    %128 = vset.pattern.permute.xlu0 0
    %129 = vperm.xlu0 %128, %v124
    %v130 = vpop.permute.xlu0 %129
    %133 = vset.pattern.permute.xlu0 0
    %134 = vperm.xlu0 %133, %v126
    %v135 = vpop.permute.xlu0 %134
    %v137 = vmul.f32 %v130, %v33
    %v138 = vmul.f32 %v135, %v34
    %v139 = vsel %vm44, %v137, 0.0
    %v140 = vrot.slane %v139, 4
    %v141 = vadd.f32 %v139, %v140
    %v142 = vrot.slane %v141, 2
    %v143 = vadd.f32 %v141, %v142
    %v144 = vrot.slane %v143, 1
    %v145 = vadd.f32 %v143, %v144
    %v146 = vsel %vm44, %v138, 0.0
    %v147 = vrot.slane %v146, 4
    %v148 = vadd.f32 %v146, %v147
    %v149 = vrot.slane %v148, 2
    %v150 = vadd.f32 %v148, %v149
    %v151 = vrot.slane %v150, 1
    %v152 = vadd.f32 %v150, %v151
    %v155 = vsel %vm67, %v152, %v145
    %vm157 = vcmask 254976
    %158 = vst.msk [vmem:[#allocation6] sm:$0x3] %vm157, %v155
    %v159 = vlaneseq
    %v160 = vshrl.u32 %v159, 7
    %v161 = vsub.s32 %v58, %v160
    %v162 = vrot.slane %v130, %v161
    %v163 = vlaneseq
    %v164 = vshrl.u32 %v163, 7
    %v165 = vsub.s32 %v58, %v164
    %v166 = vrot.slane %v135, %v165
    %v167 = vsel %vm67, %v166, %v162
    %169 = vst.msk [vmem:[#allocation7] sm:$0x3] %vm70, %v167
    // Predicated region
    $region18: #{tpu_custom_call.1} parent=1 // pred_check
      _
    $region19: #{tpu_custom_call.1} parent=1 // pred_check_branch
      %171 = sbr.rel (0) target = $region21
    $region20: #{tpu_custom_call.1} parent=1 // pred_region
      %s173 = ssub.s32 32, 32
      %174 = vsyncadd [#allocation5], %s173
      %s176 = sshll.u32 [#allocation6], 4
      %s177 = int_to_ptr.vmem [resolvable:$true] %s176
      %179 = dma.vmem_to_hbm [thread:$0]  %s177, 32, %s3, [#allocation5]
    $region21: #{tpu_custom_call.1} parent=1 // pred_fallthru
      _
    // Predicated region
    $region22: #{tpu_custom_call.1} parent=1 // pred_check
      _
    $region23: #{tpu_custom_call.1} parent=1 // pred_check_branch
      %181 = sbr.rel (0) target = $region25
    $region24: #{tpu_custom_call.1} parent=1 // pred_region
      %s183 = ssub.s32 32, 32
      %184 = vsyncadd [#allocation8], %s183
      %s186 = sshll.u32 [#allocation7], 4
      %s187 = int_to_ptr.vmem [resolvable:$true] %s186
      %189 = dma.vmem_to_hbm [thread:$0]  %s187, 32, %s4, [#allocation8]
    $region25: #{tpu_custom_call.1} parent=1 // pred_fallthru
      _
    // Predicated region
    $region26: #{tpu_custom_call.1} parent=1 // pred_check
      _
    $region27: #{tpu_custom_call.1} parent=1 // pred_check_branch
      %191 = sbr.rel (0) target = $region29
    $region28: #{tpu_custom_call.1} parent=1 // pred_region
      %192 = dma.done [#allocation5], 32
    $region29: #{tpu_custom_call.1} parent=1 // pred_fallthru
      _
    // Predicated region
    $region30: #{tpu_custom_call.1} parent=1 // pred_check
      _
    $region31: #{tpu_custom_call.1} parent=1 // pred_check_branch
      %194 = sbr.rel (0) target = $region33
    $region32: #{tpu_custom_call.1} parent=1 // pred_region
      %195 = dma.done [#allocation8], 32
    $region33: #{tpu_custom_call.1} parent=1 // pred_fallthru
      _
    %196 = vsyncpa [#allocation4], 1
    %197 = vsyncpa [#allocation5], 1
    %198 = vsyncpa [#allocation8], 1

</llo_original>
